<compile_context>
chip_gen: v6e
topology: v6e:2x2x1
jax: 0.10.0
libtpu: 0.0.40
codegen_flags: <defaults>
</compile_context>

<pallas_src>
import functools

import jax
import jax.numpy as jnp
from jax.experimental import pallas as pl
from jax.experimental.pallas import tpu as pltpu


_NSPLIT = 2                           # leading "parallel" axis: 2 TCs on v7x, harmless elsewhere
_LANE = 128
_MAX_TB = 8192                        # cap on batch-tile width (lanes)
_VMEM_INPUT_BUDGET = 8 * 1024 * 1024  # bytes for the double-buffered h1+h2 tiles


def _round_up(x, m):
    return ((x + m - 1) // m) * m


def _hash_loss_kernel(h1_ref, h2_ref, y_ref, out_ref, acc_ref, *,
                      margin_val, inv_d, half_inv_b, alpha_inv_bd):
    t = pl.program_id(1)

    @pl.when(t == 0)
    def _():
        acc_ref[...] = jnp.zeros_like(acc_ref)

    h1 = h1_ref[...].astype(jnp.float32)      # (D, TB)
    h2 = h2_ref[...].astype(jnp.float32)      # (D, TB)
    y = y_ref[...].astype(jnp.float32)        # (1, TB)

    diff = h1 - h2
    # Per-sample MSE over the full hash dim (sublane axis -> VPU adds across vregs).
    sq = jnp.sum(diff * diff, axis=0, keepdims=True) * inv_d            # (1, TB)

    pos = (1.0 - y) * sq
    neg = y * jnp.maximum(0.0, margin_val - sq)
    reg = jnp.sum(jnp.abs(jnp.abs(h1) - 1.0) + jnp.abs(jnp.abs(h2) - 1.0),
                  axis=0, keepdims=True)                                # (1, TB)

    # Lane-wise running sum; normalization constants folded in (true B, full D).
    acc_ref[...] += half_inv_b * (pos + neg) + alpha_inv_bd * reg

    # Single full reduction + store only at the last step of the reduction axis.
    @pl.when(t == pl.num_programs(1) - 1)
    def _():
        partial = jnp.sum(acc_ref[...])
        out_ref[...] = jnp.full(out_ref.shape, partial, dtype=out_ref.dtype)


def hash_loss(h1, h2, y, *, margin=0.5, alpha=0.01):
    """Pallas TPU implementation of HashLossFunc.forward. Returns a scalar."""
    h1 = jnp.asarray(h1)
    h2 = jnp.asarray(h2)
    if not jnp.issubdtype(h1.dtype, jnp.floating):
        h1 = h1.astype(jnp.float32)
    h2 = h2.astype(h1.dtype)
    assert h1.shape == h2.shape and h1.ndim == 2
    b, d = h1.shape
    y = jnp.asarray(y, jnp.float32).reshape(1, b)

    itemsize = jnp.dtype(h1.dtype).itemsize

    # Batch tile: as large as the VMEM budget allows (2 inputs x 2 buffers), but
    # never bigger than needed for this batch, always a multiple of 128 lanes.
    per_split = -(-b // _NSPLIT)
    tb_fit = max(_LANE, (_VMEM_INPUT_BUDGET // (4 * d * itemsize)) // _LANE * _LANE)
    tb = min(_MAX_TB, tb_fit, _round_up(per_split, _LANE))
    b_pad = _round_up(b, _NSPLIT * tb)
    nt = b_pad // (_NSPLIT * tb)          # grid steps per core-split
    pad = b_pad - b

    # Lane-dense (D, B) layout. Padding is "neutral": h=1 -> |abs(h)-1| = 0 and
    # diff = 0; y=0 -> pos & neg vanish, so padded columns contribute exactly 0
    # and all means are divided by the true B / B*D below.
    h1t = jnp.pad(h1.T, ((0, 0), (0, pad)), constant_values=1)
    h2t = jnp.pad(h2.T, ((0, 0), (0, pad)), constant_values=1)
    yt = jnp.pad(y, ((0, 0), (0, pad)), constant_values=0)

    kernel = functools.partial(
        _hash_loss_kernel,
        margin_val=float(margin) * d,      # full (untiled) hash dimension
        inv_d=1.0 / d,
        half_inv_b=0.5 / b,                # true batch size, not padded
        alpha_inv_bd=float(alpha) / (b * d),
    )

    col_map = lambda c, t: (0, c * nt + t)
    grid_spec = pltpu.PrefetchScalarGridSpec(
        num_scalar_prefetch=0,
        grid=(_NSPLIT, nt),
        in_specs=[
            pl.BlockSpec((d, tb), col_map),
            pl.BlockSpec((d, tb), col_map),
            pl.BlockSpec((1, tb), col_map),
        ],
        out_specs=pl.BlockSpec((1, 8, _LANE), lambda c, t: (c, 0, 0)),
        scratch_shapes=[pltpu.VMEM((1, tb), jnp.float32)],
    )

    cost = pl.CostEstimate(
        flops=10 * b * d,
        transcendentals=0,
        bytes_accessed=2 * b * d * itemsize + b * 4 + _NSPLIT * 8 * _LANE * 4,
    )

    out = pl.pallas_call(
        kernel,
        out_shape=jax.ShapeDtypeStruct((_NSPLIT, 8, _LANE), jnp.float32),
        grid_spec=grid_spec,
        compiler_params=pltpu.CompilerParams(
            dimension_semantics=("parallel", "arbitrary"),
            vmem_limit_bytes=32 * 1024 * 1024,
        ),
        cost_estimate=cost,
    )(h1t, h2t, yt)

    # Each core-split wrote its partial loss; combine in the wrapper.
    return jnp.sum(out[:, 0, 0])


def _hash_loss_ref(h1, h2, y, *, margin=0.5, alpha=0.01):
    # Pure-JAX reference mirroring the PyTorch module, for verification.
    d = h1.shape[1]
    margin_val = margin * d
    sq = jnp.mean((h1 - h2) ** 2, axis=1)
    pos = jnp.mean(0.5 * (1.0 - y) * sq)
    neg = jnp.mean(0.5 * y * jnp.maximum(0.0, margin_val - sq))
    reg = alpha * (jnp.mean(jnp.abs(jnp.abs(h1) - 1.0))
                   + jnp.mean(jnp.abs(jnp.abs(h2) - 1.0)))
    return pos + neg + reg


if __name__ == "__main__":
    key = jax.random.PRNGKey(0)
    k1, k2, k3, k4, k5, k6 = jax.random.split(key, 6)

    # Small shapes consistent with the module: batch of hash-code pairs, 32-d hash.
    B, D = 8, 32
    h1 = jax.random.normal(k1, (B, D), dtype=jnp.float32)
    h2 = jax.random.normal(k2, (B, D), dtype=jnp.float32)
    y = jax.random.bernoulli(k3, 0.5, (B,)).astype(jnp.float32)  # 0=similar, 1=dissimilar

    loss = jax.block_until_ready(hash_loss(h1, h2, y, margin=0.5, alpha=0.01))
    ref = _hash_loss_ref(h1, h2, y, margin=0.5, alpha=0.01)
    assert jnp.allclose(loss, ref, rtol=1e-5, atol=1e-5), (loss, ref)

    # Ragged batch (exercises padding path) + bf16 inputs (exercises pass-through).
    B2, D2 = 200, 48
    h1b = jax.random.normal(k4, (B2, D2), dtype=jnp.float32).astype(jnp.bfloat16)
    h2b = jax.random.normal(k5, (B2, D2), dtype=jnp.float32).astype(jnp.bfloat16)
    yb = jax.random.bernoulli(k6, 0.5, (B2,)).astype(jnp.float32)
    loss2 = jax.block_until_ready(hash_loss(h1b, h2b, yb, margin=0.5, alpha=0.01))
    ref2 = _hash_loss_ref(h1b.astype(jnp.float32), h2b.astype(jnp.float32), yb,
                          margin=0.5, alpha=0.01)
    assert jnp.allclose(loss2, ref2, rtol=1e-4, atol=1e-4), (loss2, ref2)

    print("KERNEL_OK")
</pallas_src>

<mosaic_0001>
module attributes {stable_mosaic.version = 11 : i64} {
  func.func @_hash_loss_kernel(%arg0: i32, %arg1: i32, %arg2: memref<32x128xf32, #tpu.memory_space<vmem>>, %arg3: memref<32x128xf32, #tpu.memory_space<vmem>>, %arg4: memref<1x128xf32, #tpu.memory_space<vmem>>, %arg5: memref<1x8x128xf32, #tpu.memory_space<vmem>>, %arg6: memref<1x128xf32, #tpu.memory_space<vmem>>) attributes {dimension_semantics = [#tpu.dimension_semantics<parallel>, #tpu.dimension_semantics<arbitrary>], iteration_bounds = array<i64: 2, 1>, scalar_prefetch = 0 : i64, scratch_operands = 1 : i64, tpu.core_type = #tpu.core_type<tc>, window_params = [{transform_indices = @transform_0, window_bounds = array<i64: 32, 128>}, {transform_indices = @transform_1, window_bounds = array<i64: 32, 128>}, {transform_indices = @transform_2, window_bounds = array<i64: 1, 128>}, {transform_indices = @transform_3, window_bounds = array<i64: 1, 8, 128>}]} {
    %c0_i32 = arith.constant 0 : i32
    %0 = arith.cmpi eq, %arg1, %c0_i32 : i32
    %1 = arith.extui %0 : i1 to i32
    %c0_i32_0 = arith.constant 0 : i32
    %2 = arith.cmpi ne, %1, %c0_i32_0 : i32
    scf.if %2 {
      %cst_21 = arith.constant 0.000000e+00 : f32
      %43 = vector.broadcast %cst_21 : f32 to vector<1x128xf32>
      %c0_22 = arith.constant 0 : index
      %c0_23 = arith.constant 0 : index
      %44 = vector.load %arg6[%c0_22, %c0_23] : memref<1x128xf32, #tpu.memory_space<vmem>>, vector<1x128xf32>
      tpu.vector_store %arg6[%c0_22, %c0_23], %43 {strides = array<i32>} : memref<1x128xf32, #tpu.memory_space<vmem>>, vector<1x128xf32>,
    } else {
    }
    %c0 = arith.constant 0 : index
    %c0_1 = arith.constant 0 : index
    %3 = vector.load %arg2[%c0, %c0_1] : memref<32x128xf32, #tpu.memory_space<vmem>>, vector<32x128xf32>
    %c0_2 = arith.constant 0 : index
    %c0_3 = arith.constant 0 : index
    %4 = vector.load %arg3[%c0_2, %c0_3] : memref<32x128xf32, #tpu.memory_space<vmem>>, vector<32x128xf32>
    %c0_4 = arith.constant 0 : index
    %c0_5 = arith.constant 0 : index
    %5 = vector.load %arg4[%c0_4, %c0_5] : memref<1x128xf32, #tpu.memory_space<vmem>>, vector<1x128xf32>
    %6 = arith.subf %3, %4 : vector<32x128xf32>
    %7 = arith.mulf %6, %6 : vector<32x128xf32>
    %cst = arith.constant dense<0.000000e+00> : vector<128xf32>
    %8 = vector.multi_reduction <add>, %7, %cst [0] : vector<32x128xf32> to vector<128xf32>
    %9 = vector.shape_cast %8 : vector<128xf32> to vector<1x128xf32>
    %cst_6 = arith.constant 3.125000e-02 : f32
    %10 = vector.broadcast %cst_6 : f32 to vector<1x128xf32>
    %11 = arith.mulf %9, %10 : vector<1x128xf32>
    %cst_7 = arith.constant 1.000000e+00 : f32
    %12 = vector.broadcast %cst_7 : f32 to vector<1x128xf32>
    %13 = arith.subf %12, %5 : vector<1x128xf32>
    %14 = arith.mulf %13, %11 : vector<1x128xf32>
    %cst_8 = arith.constant 1.600000e+01 : f32
    %15 = vector.broadcast %cst_8 : f32 to vector<1x128xf32>
    %16 = arith.subf %15, %11 : vector<1x128xf32>
    %cst_9 = arith.constant 0.000000e+00 : f32
    %17 = vector.broadcast %cst_9 : f32 to vector<1x128xf32>
    %18 = arith.maximumf %17, %16 : vector<1x128xf32>
    %19 = arith.mulf %5, %18 : vector<1x128xf32>
    %20 = math.absf %3 : vector<32x128xf32>
    %cst_10 = arith.constant 1.000000e+00 : f32
    %21 = vector.broadcast %cst_10 : f32 to vector<32x128xf32>
    %22 = arith.subf %20, %21 : vector<32x128xf32>
    %23 = math.absf %22 : vector<32x128xf32>
    %24 = math.absf %4 : vector<32x128xf32>
    %cst_11 = arith.constant 1.000000e+00 : f32
    %25 = vector.broadcast %cst_11 : f32 to vector<32x128xf32>
    %26 = arith.subf %24, %25 : vector<32x128xf32>
    %27 = math.absf %26 : vector<32x128xf32>
    %28 = arith.addf %23, %27 : vector<32x128xf32>
    %cst_12 = arith.constant dense<0.000000e+00> : vector<128xf32>
    %29 = vector.multi_reduction <add>, %28, %cst_12 [0] : vector<32x128xf32> to vector<128xf32>
    %30 = vector.shape_cast %29 : vector<128xf32> to vector<1x128xf32>
    %c0_13 = arith.constant 0 : index
    %c0_14 = arith.constant 0 : index
    %31 = vector.load %arg6[%c0_13, %c0_14] : memref<1x128xf32, #tpu.memory_space<vmem>>, vector<1x128xf32>
    %32 = arith.addf %14, %19 : vector<1x128xf32>
    %cst_15 = arith.constant 6.250000e-02 : f32
    %33 = vector.broadcast %cst_15 : f32 to vector<1x128xf32>
    %34 = arith.mulf %33, %32 : vector<1x128xf32>
    %cst_16 = arith.constant 3.906250e-05 : f32
    %35 = vector.broadcast %cst_16 : f32 to vector<1x128xf32>
    %36 = arith.mulf %35, %30 : vector<1x128xf32>
    %37 = arith.addf %34, %36 : vector<1x128xf32>
    %38 = arith.addf %31, %37 : vector<1x128xf32>
    %c0_17 = arith.constant 0 : index
    %c0_18 = arith.constant 0 : index
    %39 = vector.load %arg6[%c0_17, %c0_18] : memref<1x128xf32, #tpu.memory_space<vmem>>, vector<1x128xf32>
    tpu.vector_store %arg6[%c0_17, %c0_18], %38 {strides = array<i32>} : memref<1x128xf32, #tpu.memory_space<vmem>>, vector<1x128xf32>,
    %c0_i32_19 = arith.constant 0 : i32
    %40 = arith.cmpi eq, %arg1, %c0_i32_19 : i32
    %41 = arith.extui %40 : i1 to i32
    %c0_i32_20 = arith.constant 0 : i32
    %42 = arith.cmpi ne, %41, %c0_i32_20 : i32
    scf.if %42 {
      %c0_21 = arith.constant 0 : index
      %c0_22 = arith.constant 0 : index
      %43 = vector.load %arg6[%c0_21, %c0_22] : memref<1x128xf32, #tpu.memory_space<vmem>>, vector<1x128xf32>
      %44 = vector.shape_cast %43 : vector<1x128xf32> to vector<1x1x128xf32>
      %cst_23 = arith.constant dense<0.000000e+00> : vector<1xf32>
      %45 = vector.multi_reduction <add>, %44, %cst_23 [1, 2] : vector<1x1x128xf32> to vector<1xf32>
      %46 = vector.shape_cast %45 : vector<1xf32> to vector<1x1x1xf32>
      %47 = vector.extract %46[0, 0, 0] : f32 from vector<1x1x1xf32>
      %48 = vector.broadcast %47 : f32 to vector<1x8x128xf32>
      %c0_24 = arith.constant 0 : index
      %c0_25 = arith.constant 0 : index
      %c0_26 = arith.constant 0 : index
      %49 = vector.load %arg5[%c0_24, %c0_25, %c0_26] : memref<1x8x128xf32, #tpu.memory_space<vmem>>, vector<1x8x128xf32>
      tpu.vector_store %arg5[%c0_24, %c0_25, %c0_26], %48 {strides = array<i32>} : memref<1x8x128xf32, #tpu.memory_space<vmem>>, vector<1x8x128xf32>,
    } else {
    }
    return
  }
  func.func @transform_0(%arg0: i32, %arg1: i32) -> (i32, i32) {
    %c1_i32 = arith.constant 1 : i32
    %0 = arith.muli %arg0, %c1_i32 : i32
    %1 = arith.addi %0, %arg1 : i32
    %c0_i32 = arith.constant 0 : i32
    %c0_i32_0 = arith.constant 0 : i32
    return %c0_i32, %1 : i32, i32
  }
  func.func @transform_1(%arg0: i32, %arg1: i32) -> (i32, i32) {
    %c1_i32 = arith.constant 1 : i32
    %0 = arith.muli %arg0, %c1_i32 : i32
    %1 = arith.addi %0, %arg1 : i32
    %c0_i32 = arith.constant 0 : i32
    %c0_i32_0 = arith.constant 0 : i32
    return %c0_i32, %1 : i32, i32
  }
  func.func @transform_2(%arg0: i32, %arg1: i32) -> (i32, i32) {
    %c1_i32 = arith.constant 1 : i32
    %0 = arith.muli %arg0, %c1_i32 : i32
    %1 = arith.addi %0, %arg1 : i32
    %c0_i32 = arith.constant 0 : i32
    %c0_i32_0 = arith.constant 0 : i32
    return %c0_i32, %1 : i32, i32
  }
  func.func @transform_3(%arg0: i32, %arg1: i32) -> (i32, i32, i32) {
    %c0_i32 = arith.constant 0 : i32
    %c0_i32_0 = arith.constant 0 : i32
    %c0_i32_1 = arith.constant 0 : i32
    return %arg0, %c0_i32, %c0_i32_0 : i32, i32, i32
  }
}

</mosaic_0001>

<llo_original>
// kernel: tpu_custom_call.1
$region0: #{tpu_custom_call.1}
  #allocation0 [shape = 'u32[]', space=smem, size = 0x4, offset = 0x4, fixed_abs, tag = 'smem constant byte address 0x4 - core index']
  #allocation1 [shape = 'u32[144,128]{1,0:T(1,128)}', space=vmem, size = 0x12000, scoped, tag = 'internal scratch']
  #allocation2 [shape = 'f32[1,128]{1,0:T(1,128)}', space=vmem, size = 0x200, scoped, tag = 'scratch operand']
  %s0 = inlined_call_operand.hbm [shape: f32[32,256], index: 0, kind: input, shape index: {}]
  %s1 = inlined_call_operand.hbm [shape: f32[32,256], index: 1, kind: input, shape index: {}]
  %s2 = inlined_call_operand.vmem [shape: f32[1,256], index: 2, kind: input, shape index: {}]
  %s3 = inlined_call_operand.hbm [shape: f32[2,8,128], index: 3, kind: output, shape index: {}]
  %s4 = sld [smem:[#allocation0]]
  $region61: #{tpu_custom_call.1} parent=0
    _
  %s6 = ssub.s32 1, %s4
  %s7 = scalar_select 0, %s6, %s4
  $region1: #{tpu_custom_call.1} parent=0
    #allocation3 [shape = 'u8[32768]{0}', space=vmem, size = 0x8000, scoped, tag = 'input window, operand 0']
    #allocation4 [shape = 's32[2]{0}', space=sflag, size = 0x8, scoped, tag = 'scoped memory for tpu_custom_call.1']
    #allocation5 [shape = 's32[2]{0}', space=sflag, size = 0x8, scoped, tag = 'scoped memory for tpu_custom_call.1']
    #allocation6 [shape = 'u8[32768]{0}', space=vmem, size = 0x8000, scoped, tag = 'input window, operand 1']
    #allocation7 [shape = 's32[2]{0}', space=sflag, size = 0x8, scoped, tag = 'scoped memory for tpu_custom_call.1']
    #allocation8 [shape = 'u8[8192]{0}', space=vmem, size = 0x2000, scoped, tag = 'output window, operand 0']
    %8 = vsyncpa [#allocation4], 0
    %s9 = scalar_lea.sflag [#allocation4], 1
    %10 = vsyncpa %s9, 0
    %11 = vsyncpa [#allocation7], 0
    %s12 = scalar_lea.sflag [#allocation7], 1
    %13 = vsyncpa %s12, 0
    %14 = vsyncpa [#allocation5], 0
    %s15 = scalar_lea.sflag [#allocation5], 1
    %16 = vsyncpa %s15, 0
    loop: start=0, step=1, limit=4
    $region2: #{tpu_custom_call.1} parent=1 // loop_pre_header
      _
    $region3: #{tpu_custom_call.1} parent=1 // loop_header
      %s18 = sphi 0, %s22
      %p19 = scmp.ge.s32.totalorder %s18, 4
      %s25 = sphi 0, %s37
      %s26 = sphi 0, %s33
      %s27 = sphi 0, %s25
      %s28 = sphi 0, %s26
      %s29 = sphi 0, %s27
      %s30 = sphi 0, %s28
      %s42 = sphi 0, %s44
      %s45 = sphi 0, %s42
      %s46 = sphi 0, %s45
      %s62 = sphi 0, %s46
      %s70 = sphi 0, %s72
      %s73 = sphi 0, %s70
      %s74 = sphi 0, %s73
      %s90 = sphi 0, %s74
      %s98 = sphi 0, %s100
      %s101 = sphi 0, %s98
      %s102 = sphi 0, %s101
      %s118 = sphi 0, %s102
      %s124 = sphi 0, %s126
      %s127 = sphi 0, %s124
      %s128 = sphi 0, %s127
      %s144 = sphi 0, %s128
    $region4: #{tpu_custom_call.1} parent=1 // loop_header_branch
      %21 = sbr.rel (%p19) target = $region8
    $region5: #{tpu_custom_call.1} parent=1 // loop_body
      %s23 = ssub.s32 %s18, 1
      %s24 = ssub.s32 %s18, 2
      %s31 = sadd.s32 1, %s26
      %p32 = scmp.ge.s32.totalorder %s31, 1
      %s33 = scalar_select %p32, 0, %s31
      %s34 = sadd.s32 1, %s25
      %s35 = scalar_select %p32, %s34, %s25
      %p36 = scmp.ge.s32.totalorder %s35, 2
      %s37 = scalar_select %p36, 0, %s35
      %s38 = sadd.s32 %s25, %s26
      %s39 = sadd.s32 %s37, %s33
      %s40 = ssub.s32 %s38, %s39
      %p41 = scmp.eq.s32.totalorder %s40, 0
      %s43 = sadd.s32 %s42, 1
      %s44 = scalar_select %p41, %s42, %s43
      %p47 = pneg %p41
      %p48 = scmp.eq.s32.totalorder %s18, 1
      %p49 = por %p47, %p48
      %p50 = scmp.ne.s32.totalorder %s42, %s45
      %p51 = scmp.eq.s32.totalorder %s18, 0
      %p52 = por %p50, %p51
      %p53 = scmp.ne.s32.totalorder %s42, %s45
      %p54 = scmp.eq.s32.totalorder %s23, 1
      %p55 = por %p53, %p54
      %p56 = scmp.ne.s32.totalorder %s45, %s46
      %p57 = scmp.eq.s32.totalorder %s23, 0
      %p58 = por %p56, %p57
      %p59 = scmp.ne.s32.totalorder %s45, %s46
      %p60 = scmp.eq.s32.totalorder %s24, 1
      %p61 = por %p59, %p60
      %p63 = scmp.ne.s32.totalorder %s46, %s62
      %p64 = scmp.eq.s32.totalorder %s24, 0
      %p65 = por %p63, %p64
      %s66 = sadd.s32 %s25, %s26
      %s67 = sadd.s32 %s37, %s33
      %s68 = ssub.s32 %s66, %s67
      %p69 = scmp.eq.s32.totalorder %s68, 0
      %s71 = sadd.s32 %s70, 1
      %s72 = scalar_select %p69, %s70, %s71
      %p75 = pneg %p69
      %p76 = scmp.eq.s32.totalorder %s18, 1
      %p77 = por %p75, %p76
      %p78 = scmp.ne.s32.totalorder %s70, %s73
      %p79 = scmp.eq.s32.totalorder %s18, 0
      %p80 = por %p78, %p79
      %p81 = scmp.ne.s32.totalorder %s70, %s73
      %p82 = scmp.eq.s32.totalorder %s23, 1
      %p83 = por %p81, %p82
      %p84 = scmp.ne.s32.totalorder %s73, %s74
      %p85 = scmp.eq.s32.totalorder %s23, 0
      %p86 = por %p84, %p85
      %p87 = scmp.ne.s32.totalorder %s73, %s74
      %p88 = scmp.eq.s32.totalorder %s24, 1
      %p89 = por %p87, %p88
      %p91 = scmp.ne.s32.totalorder %s74, %s90
      %p92 = scmp.eq.s32.totalorder %s24, 0
      %p93 = por %p91, %p92
      %s94 = sadd.s32 %s25, %s26
      %s95 = sadd.s32 %s37, %s33
      %s96 = ssub.s32 %s94, %s95
      %p97 = scmp.eq.s32.totalorder %s96, 0
      %s99 = sadd.s32 %s98, 1
      %s100 = scalar_select %p97, %s98, %s99
      %p103 = pneg %p97
      %p104 = scmp.eq.s32.totalorder %s18, 1
      %p105 = por %p103, %p104
      %p106 = scmp.ne.s32.totalorder %s98, %s101
      %p107 = scmp.eq.s32.totalorder %s18, 0
      %p108 = por %p106, %p107
      %p109 = scmp.ne.s32.totalorder %s98, %s101
      %p110 = scmp.eq.s32.totalorder %s23, 1
      %p111 = por %p109, %p110
      %p112 = scmp.ne.s32.totalorder %s101, %s102
      %p113 = scmp.eq.s32.totalorder %s23, 0
      %p114 = por %p112, %p113
      %p115 = scmp.ne.s32.totalorder %s101, %s102
      %p116 = scmp.eq.s32.totalorder %s24, 1
      %p117 = por %p115, %p116
      %p119 = scmp.ne.s32.totalorder %s102, %s118
      %p120 = scmp.eq.s32.totalorder %s24, 0
      %p121 = por %p119, %p120
      %s122 = ssub.s32 %s25, %s37
      %p123 = scmp.eq.s32.totalorder %s122, 0
      %s125 = sadd.s32 %s124, 1
      %s126 = scalar_select %p123, %s124, %s125
      %p129 = pneg %p123
      %p130 = scmp.eq.s32.totalorder %s18, 1
      %p131 = por %p129, %p130
      %p132 = scmp.ne.s32.totalorder %s124, %s127
      %p133 = scmp.eq.s32.totalorder %s18, 0
      %p134 = por %p132, %p133
      %p135 = scmp.ne.s32.totalorder %s124, %s127
      %p136 = scmp.eq.s32.totalorder %s23, 1
      %p137 = por %p135, %p136
      %p138 = scmp.ne.s32.totalorder %s127, %s128
      %p139 = scmp.eq.s32.totalorder %s23, 0
      %p140 = por %p138, %p139
      %p141 = scmp.ne.s32.totalorder %s127, %s128
      %p142 = scmp.eq.s32.totalorder %s24, 1
      %p143 = por %p141, %p142
      %p145 = scmp.ne.s32.totalorder %s128, %s144
      %p146 = scmp.eq.s32.totalorder %s24, 0
      %p147 = por %p145, %p146
      %p148 = scmp.le.s32.totalorder 1, %s18
      %p149 = scmp.lt.s32.totalorder %s18, 3
      %p150 = pnand %p148, %p149
      %p151 = pneg %p150
      // Predicated region
      $region9: #{tpu_custom_call.1} parent=5 // pred_check
        _
      $region10: #{tpu_custom_call.1} parent=5 // pred_check_branch
        %153 = sbr.rel (%p150) target = $region12
      $region11: #{tpu_custom_call.1} parent=5 // pred_region
        %s154 = ssub.s32 %s18, 1
      $region12: #{tpu_custom_call.1} parent=5 // pred_fallthru
        _
      %p155 = scmp.lt.s32.totalorder %s18, 2
      // Predicated region
      $region13: #{tpu_custom_call.1} parent=5 // pred_check
        %p156 = pneg %p155
      $region14: #{tpu_custom_call.1} parent=5 // pred_check_branch
        %158 = sbr.rel (%p156) target = $region16
      $region15: #{tpu_custom_call.1} parent=5 // pred_region
        // Predicated region
        $region17: #{tpu_custom_call.1} parent=15 // pred_check
          %p159 = pneg %p52
        $region18: #{tpu_custom_call.1} parent=15 // pred_check_branch
          %161 = sbr.rel (%p159) target = $region20
        $region19: #{tpu_custom_call.1} parent=15 // pred_region
          %s162 = sand.u32 %s42, 1
          %s163 = scalar_lea.sflag [#allocation4], %s162
          %s164 = sand.u32 %s42, 1
          %s165 = smul.addr %s164, 32
          %s166 = scalar_lea.vmem [#allocation3], %s165
          %s167 = sadd.s32 %s25, %s26
          %s169 = ssub.s32 512, 512
          %170 = vsyncadd %s163, %s169
          %s171 = smul.addr %s167, 128
          %s172 = scalar_lea.hbm %s0, %s171
          %s173 = sshll.u32 %s166, 4
          %s174 = int_to_ptr.vmem [resolvable:$true] %s173
          %179 = dma.hbm_to_vmem [thread:$0]  %s172, 512, %s174, %s163, 256, 128, 8
        $region20: #{tpu_custom_call.1} parent=15 // pred_fallthru
          _
        // Predicated region
        $region21: #{tpu_custom_call.1} parent=15 // pred_check
          %p180 = pneg %p80
        $region22: #{tpu_custom_call.1} parent=15 // pred_check_branch
          %182 = sbr.rel (%p180) target = $region24
        $region23: #{tpu_custom_call.1} parent=15 // pred_region
          %s183 = sand.u32 %s70, 1
          %s184 = scalar_lea.sflag [#allocation7], %s183
          %s185 = sand.u32 %s70, 1
          %s186 = smul.addr %s185, 32
          %s187 = scalar_lea.vmem [#allocation6], %s186
          %s188 = sadd.s32 %s25, %s26
          %s190 = ssub.s32 512, 512
          %191 = vsyncadd %s184, %s190
          %s192 = smul.addr %s188, 128
          %s193 = scalar_lea.hbm %s1, %s192
          %s194 = sshll.u32 %s187, 4
          %s195 = int_to_ptr.vmem [resolvable:$true] %s194
          %200 = dma.hbm_to_vmem [thread:$0]  %s193, 512, %s195, %s184, 256, 128, 8
        $region24: #{tpu_custom_call.1} parent=15 // pred_fallthru
          _
        // Predicated region
        $region25: #{tpu_custom_call.1} parent=15 // pred_check
          %p201 = pneg %p108
        $region26: #{tpu_custom_call.1} parent=15 // pred_check_branch
          %203 = sbr.rel (%p201) target = $region28
        $region27: #{tpu_custom_call.1} parent=15 // pred_region
          %s204 = sadd.s32 %s25, %s26
          %p205 = scmp.lt.s32.totalorder %s204, 1
          %s206 = scalar_select %p205, %s204, 1
          %s207 = scalar_lea.vmem %s2, %s206
          %s208 = sadd.s32 %s25, %s26
        $region28: #{tpu_custom_call.1} parent=15 // pred_fallthru
          _
      $region16: #{tpu_custom_call.1} parent=5 // pred_fallthru
        _
      %p209 = scmp.le.s32.totalorder 1, %s18
      %p210 = scmp.lt.s32.totalorder %s18, 3
      %p211 = pnand %p209, %p210
      %p212 = pneg %p211
      // Predicated region
      $region29: #{tpu_custom_call.1} parent=5 // pred_check
        _
      $region30: #{tpu_custom_call.1} parent=5 // pred_check_branch
        %214 = sbr.rel (%p211) target = $region32
      $region31: #{tpu_custom_call.1} parent=5 // pred_region
        %s215 = ssub.s32 %s18, 1
        %s216 = sand.u32 %s45, 1
        %s217 = scalar_lea.sflag [#allocation4], %s216
        %s218 = sand.u32 %s45, 1
        %s219 = smul.addr %s218, 32
        %s220 = scalar_lea.vmem [#allocation3], %s219
        // Predicated region
        $region33: #{tpu_custom_call.1} parent=31 // pred_check
          %p221 = pneg %p58
        $region34: #{tpu_custom_call.1} parent=31 // pred_check_branch
          %223 = sbr.rel (%p221) target = $region36
        $region35: #{tpu_custom_call.1} parent=31 // pred_region
          %224 = dma.done %s217, 512
        $region36: #{tpu_custom_call.1} parent=31 // pred_fallthru
          _
        %s225 = sand.u32 %s73, 1
        %s226 = scalar_lea.sflag [#allocation7], %s225
        %s227 = sand.u32 %s73, 1
        %s228 = smul.addr %s227, 32
        %s229 = scalar_lea.vmem [#allocation6], %s228
        // Predicated region
        $region37: #{tpu_custom_call.1} parent=31 // pred_check
          %p230 = pneg %p86
        $region38: #{tpu_custom_call.1} parent=31 // pred_check_branch
          %232 = sbr.rel (%p230) target = $region40
        $region39: #{tpu_custom_call.1} parent=31 // pred_region
          %233 = dma.done %s226, 512
        $region40: #{tpu_custom_call.1} parent=31 // pred_fallthru
          _
        %s234 = sand.u32 %s45, 1
        %s235 = scalar_lea.sflag [#allocation4], %s234
        %s236 = sand.u32 %s45, 1
        %s237 = smul.addr %s236, 32
        %s238 = scalar_lea.vmem [#allocation3], %s237
        %p239 = pneg %p58
        %p240 = pneg %p55
        %s241 = sand.u32 %s73, 1
        %s242 = scalar_lea.sflag [#allocation7], %s241
        %s243 = sand.u32 %s73, 1
        %s244 = smul.addr %s243, 32
        %s245 = scalar_lea.vmem [#allocation6], %s244
        %p246 = pneg %p86
        %p247 = pneg %p83
        %s248 = sadd.s32 %s27, %s28
        %p249 = scmp.lt.s32.totalorder %s248, 1
        %s250 = scalar_select %p249, %s248, 1
        %s251 = scalar_lea.vmem %s2, %s250
        %p252 = pneg %p114
        %p253 = pneg %p111
        %p254 = pneg %p140
        %p255 = pneg %p137
        %s256 = sand.u32 %s127, 1
        %s257 = scalar_lea.sflag [#allocation5], %s256
        %s258 = sand.u32 %s127, 1
        %s259 = smul.addr %s258, 8
        %s260 = scalar_lea.vmem [#allocation8], %s259
        %s261 = sadd.s32 %s27, %s28
        %s262 = sadd.s32 %s27, %s28
        %s263 = sadd.s32 %s27, %s28
        %p264 = scmp.lt.s32.totalorder %s263, 1
        %s265 = scalar_select %p264, %s263, 1
        %s266 = scalar_lea.vmem %s2, %s265
        %s267 = sadd.s32 %s27, %s28
        %p268 = scmp.eq.s32.totalorder %s28, 0
        // Predicated region
        $region41: #{tpu_custom_call.1} parent=31 // pred_check
          %p269 = pneg %p268
        $region42: #{tpu_custom_call.1} parent=31 // pred_check_branch
          %271 = sbr.rel (%p269) target = $region44
        $region43: #{tpu_custom_call.1} parent=31 // pred_region
          %272 = vst [vmem:[#allocation2] sm:$0x1] 0.0
        $region44: #{tpu_custom_call.1} parent=31 // pred_fallthru
          _
        %v273 = vld [vmem:[%s220] sm:$0xff]
        %v274 = vld [vmem:[%s220 + $0x8] sm:$0xff]
        %v275 = vld [vmem:[%s220 + $0x10] sm:$0xff]
        %v276 = vld [vmem:[%s220 + $0x18] sm:$0xff]
        %v277 = vld [vmem:[%s229] sm:$0xff]
        %v278 = vld [vmem:[%s229 + $0x8] sm:$0xff]
        %v279 = vld [vmem:[%s229 + $0x10] sm:$0xff]
        %v280 = vld [vmem:[%s229 + $0x18] sm:$0xff]
        %v281 = vld [vmem:[%s266] sm:$0x1]
        %v282 = vsub.f32 %v273, %v277
        %v283 = vsub.f32 %v274, %v278
        %v284 = vsub.f32 %v275, %v279
        %v285 = vsub.f32 %v276, %v280
        %v286 = vmul.f32 %v282, %v282
        %v287 = vmul.f32 %v283, %v283
        %v288 = vmul.f32 %v284, %v284
        %v289 = vmul.f32 %v285, %v285
        %v290 = vadd.f32 %v286, %v287
        %v291 = vadd.f32 %v290, %v288
        %v292 = vadd.f32 %v291, %v289
        %v293 = vrot.slane %v292, 4
        %v294 = vadd.f32 %v292, %v293
        %v295 = vrot.slane %v294, 2
        %v296 = vadd.f32 %v294, %v295
        %v297 = vrot.slane %v296, 1
        %v298 = vadd.f32 %v296, %v297
        %v299 = vmul.f32 %v298, 0.03125
        %v300 = vsub.f32 1.0, %v281
        %v301 = vmul.f32 %v300, %v299
        %v302 = vsub.f32 16.0, %v299
        %v303 = vmax.f32 %v302, 0.0
        %v304 = vmul.f32 %v281, %v303
        %v305 = vand.u32 2147483647, %v273
        %v306 = vand.u32 2147483647, %v274
        %v307 = vand.u32 2147483647, %v275
        %v308 = vand.u32 2147483647, %v276
        %v309 = vsub.f32 %v305, 1.0
        %v310 = vsub.f32 %v306, 1.0
        %v311 = vsub.f32 %v307, 1.0
        %v312 = vsub.f32 %v308, 1.0
        %v313 = vand.u32 2147483647, %v309
        %v314 = vand.u32 2147483647, %v310
        %v315 = vand.u32 2147483647, %v311
        %v316 = vand.u32 2147483647, %v312
        %v317 = vand.u32 2147483647, %v277
        %v318 = vand.u32 2147483647, %v278
        %v319 = vand.u32 2147483647, %v279
        %v320 = vand.u32 2147483647, %v280
        %v321 = vsub.f32 %v317, 1.0
        %v322 = vsub.f32 %v318, 1.0
        %v323 = vsub.f32 %v319, 1.0
        %v324 = vsub.f32 %v320, 1.0
        %v325 = vand.u32 2147483647, %v321
        %v326 = vand.u32 2147483647, %v322
        %v327 = vand.u32 2147483647, %v323
        %v328 = vand.u32 2147483647, %v324
        %v329 = vadd.f32 %v313, %v325
        %v330 = vadd.f32 %v314, %v326
        %v331 = vadd.f32 %v315, %v327
        %v332 = vadd.f32 %v316, %v328
        %v333 = vadd.f32 %v329, %v330
        %v334 = vadd.f32 %v333, %v331
        %v335 = vadd.f32 %v334, %v332
        %v336 = vrot.slane %v335, 4
        %v337 = vadd.f32 %v335, %v336
        %v338 = vrot.slane %v337, 2
        %v339 = vadd.f32 %v337, %v338
        %v340 = vrot.slane %v339, 1
        %v341 = vadd.f32 %v339, %v340
        %v342 = vld [vmem:[#allocation2] sm:$0x1]
        %v343 = vadd.f32 %v301, %v304
        %v344 = vmul.f32 %v343, 0.0625
        %v345 = vmul.f32 %v341, 3.90625e-05
        %v346 = vadd.f32 %v344, %v345
        %v347 = vadd.f32 %v342, %v346
        %348 = vst [vmem:[#allocation2] sm:$0x1] %v347
        // Predicated region
        $region45: #{tpu_custom_call.1} parent=31 // pred_check
          %p349 = pneg %p268
        $region46: #{tpu_custom_call.1} parent=31 // pred_check_branch
          %351 = sbr.rel (%p349) target = $region48
        $region47: #{tpu_custom_call.1} parent=31 // pred_region
          %v352 = vld [vmem:[#allocation2] sm:$0x1]
          %vm353 = vcmask 1040384
          %v354 = vsel %vm353, %v352, 0.0
          %355 = vadd.xlane.f32.xlu0 %v354
          %v356 = vpop.xlane.xlu0 %355
          %v357 = vrot.slane %v356, 4
          %v358 = vadd.f32 %v356, %v357
          %v359 = vrot.slane %v358, 2
          %v360 = vadd.f32 %v358, %v359
          %v361 = vrot.slane %v360, 1
          %v362 = vadd.f32 %v360, %v361
          %s363 = vtos %v362
          %v364 = vstv %s363
          %365 = vst [vmem:[%s260] sm:$0xff] %v364
        $region48: #{tpu_custom_call.1} parent=31 // pred_fallthru
          _
        %s366 = sand.u32 %s127, 1
        %s367 = scalar_lea.sflag [#allocation5], %s366
        %s368 = sand.u32 %s127, 1
        %s369 = smul.addr %s368, 8
        %s370 = scalar_lea.vmem [#allocation8], %s369
        // Predicated region
        $region49: #{tpu_custom_call.1} parent=31 // pred_check
          %p371 = pneg %p137
        $region50: #{tpu_custom_call.1} parent=31 // pred_check_branch
          %373 = sbr.rel (%p371) target = $region52
        $region51: #{tpu_custom_call.1} parent=31 // pred_region
          %s375 = ssub.s32 128, 128
          %376 = vsyncadd %s367, %s375
          %s377 = smul.addr %s27, 128
          %s378 = scalar_lea.hbm %s3, %s377
          %s380 = sshll.u32 %s370, 4
          %s381 = int_to_ptr.vmem [resolvable:$true] %s380
          %383 = dma.vmem_to_hbm [thread:$0]  %s381, 128, %s378, %s367
        $region52: #{tpu_custom_call.1} parent=31 // pred_fallthru
          _
      $region32: #{tpu_custom_call.1} parent=5 // pred_fallthru
        _
      %p384 = scmp.le.s32.totalorder 2, %s18
      // Predicated region
      $region53: #{tpu_custom_call.1} parent=5 // pred_check
        %p385 = pneg %p384
      $region54: #{tpu_custom_call.1} parent=5 // pred_check_branch
        %387 = sbr.rel (%p385) target = $region56
      $region55: #{tpu_custom_call.1} parent=5 // pred_region
        %s388 = ssub.s32 %s18, 2
        // Predicated region
        $region57: #{tpu_custom_call.1} parent=55 // pred_check
          %p389 = pneg %p143
        $region58: #{tpu_custom_call.1} parent=55 // pred_check_branch
          %391 = sbr.rel (%p389) target = $region60
        $region59: #{tpu_custom_call.1} parent=55 // pred_region
          %s392 = sand.u32 %s128, 1
          %s393 = scalar_lea.sflag [#allocation5], %s392
          %s394 = sand.u32 %s128, 1
          %s395 = smul.addr %s394, 8
          %s396 = scalar_lea.vmem [#allocation8], %s395
          %397 = dma.done %s393, 128
        $region60: #{tpu_custom_call.1} parent=55 // pred_fallthru
          _
      $region56: #{tpu_custom_call.1} parent=5 // pred_fallthru
        _
    $region6: #{tpu_custom_call.1} parent=1 // loop_footer
      %s22 = sadd.s32 1, %s18
    $region7: #{tpu_custom_call.1} parent=1 // loop_footer_branch
      %17 = sbr.rel target = $region3
    $region8: #{tpu_custom_call.1} parent=1 // loop_exit
      _
    %398 = vsyncpa [#allocation4], 1
    %s399 = scalar_lea.sflag [#allocation4], 1
    %400 = vsyncpa %s399, 1
    %401 = vsyncpa [#allocation7], 1
    %s402 = scalar_lea.sflag [#allocation7], 1
    %403 = vsyncpa %s402, 1
    %404 = vsyncpa [#allocation5], 1
    %s405 = scalar_lea.sflag [#allocation5], 1
    %406 = vsyncpa %s405, 1

</llo_original>
